<compile_context>
chip_gen: v7x
topology: tpu7x:2x2x1
jax: 0.10.0
libtpu: 0.0.40
codegen_flags: <defaults>
</compile_context>

<pallas_src>
import functools
import math

import jax
import jax.numpy as jnp
from jax import lax
from jax.experimental import pallas as pl
from jax.experimental.pallas import tpu as pltpu


# ----------------------------- small helpers --------------------------------------- #

def _round_up(x, m):
    return (x + m - 1) // m * m


def _compiler_params(est_vmem_bytes, semantics):
    # Explicit VMEM budget with headroom: large enough for the double-buffered tiles,
    # small enough to fit every generation (v5e 16 MiB default scoped, v7x 64 MiB
    # physical per TensorCore).
    limit = int(min(48 * 2**20, max(int(est_vmem_bytes), 16 * 2**20)))
    return pltpu.CompilerParams(dimension_semantics=semantics,
                                vmem_limit_bytes=limit)


# ----------------------------- encoder kernels ------------------------------------- #

def _key_encoder_kernel(xpad_ref, w1_ref, b1_ref, w2_ref, b2_ref, out_ref):
    # key_layer: Conv1d(k=3, pad=1) -> ReLU -> Conv1d(k=1).
    # Output is written transposed ([A_pad, T_en_pad], bf16) so the attention kernel
    # can run a plain [TQ, A] @ [A, T_en] MXU contraction with no per-tile transpose.
    T = out_ref.shape[2]
    xp = xpad_ref[0]                                                  # [T+2, C_in]
    h = (jnp.dot(xp[0:T, :], w1_ref[0], preferred_element_type=jnp.float32)
         + jnp.dot(xp[1:T + 1, :], w1_ref[1], preferred_element_type=jnp.float32)
         + jnp.dot(xp[2:T + 2, :], w1_ref[2], preferred_element_type=jnp.float32)
         + b1_ref[...])
    h = jnp.maximum(h, 0.0)                                           # ReLU
    o = jnp.dot(h, w2_ref[...], preferred_element_type=jnp.float32) + b2_ref[...]
    out_ref[0] = jnp.transpose(o).astype(out_ref.dtype)               # [A_pad, T]


def _query_encoder_kernel(ypad_ref, w1_ref, b1_ref, w2_ref, b2_ref, w3_ref, b3_ref,
                          out_ref):
    # query_layer: Conv1d(k=3,pad=1) -> ReLU -> Conv1d(k=1) -> ReLU -> Conv1d(k=1)
    T = out_ref.shape[1]
    yp = ypad_ref[0]                                                  # [T+2, C_in]
    h = (jnp.dot(yp[0:T, :], w1_ref[0], preferred_element_type=jnp.float32)
         + jnp.dot(yp[1:T + 1, :], w1_ref[1], preferred_element_type=jnp.float32)
         + jnp.dot(yp[2:T + 2, :], w1_ref[2], preferred_element_type=jnp.float32)
         + b1_ref[...])
    h = jnp.maximum(h, 0.0)
    h = jnp.dot(h, w2_ref[...], preferred_element_type=jnp.float32) + b2_ref[...]
    h = jnp.maximum(h, 0.0)
    o = jnp.dot(h, w3_ref[...], preferred_element_type=jnp.float32) + b3_ref[...]
    out_ref[0] = o.astype(out_ref.dtype)                              # [T, A_pad]


def key_encoder(x, w1, b1, w2, b2, *, t_pad, a_pad, out_dtype=jnp.bfloat16):
    """x: [B, T, C_in] -> key features, pre-transposed [B, a_pad, t_pad] (bf16)."""
    B, T, C_in = x.shape
    C_mid, A = w2.shape
    # Zero-pad: 1 each side for the k=3/pad=1 conv + time padding to t_pad (exact:
    # conv outputs at positions < T are unchanged, padded positions are masked later).
    xpad = jnp.pad(x, ((0, 0), (1, 1 + t_pad - T), (0, 0)))
    w2p = jnp.pad(w2, ((0, 0), (0, a_pad - A)))
    b2p = jnp.pad(b2, ((0, 0), (0, a_pad - A)))
    est = 2 * ((t_pad + 2) * C_in * 4 + 3 * C_in * C_mid * 4 + C_mid * 4
               + C_mid * a_pad * 4 + a_pad * 4 + a_pad * t_pad * 2) + (2 << 20)
    return pl.pallas_call(
        _key_encoder_kernel,
        out_shape=jax.ShapeDtypeStruct((B, a_pad, t_pad), out_dtype),
        grid=(B,),
        in_specs=[
            pl.BlockSpec((1, t_pad + 2, C_in), lambda b: (b, 0, 0)),
            pl.BlockSpec((3, C_in, C_mid), lambda b: (0, 0, 0)),
            pl.BlockSpec((1, C_mid), lambda b: (0, 0)),
            pl.BlockSpec((C_mid, a_pad), lambda b: (0, 0)),
            pl.BlockSpec((1, a_pad), lambda b: (0, 0)),
        ],
        out_specs=pl.BlockSpec((1, a_pad, t_pad), lambda b: (b, 0, 0)),
        compiler_params=_compiler_params(est, ("parallel",)),
    )(xpad, w1, b1, w2p, b2p)


def query_encoder(y, w1, b1, w2, b2, w3, b3, *, t_pad, a_pad,
                  out_dtype=jnp.bfloat16):
    """y: [B, T, C_in] -> query features [B, t_pad, a_pad] (bf16, lane-dense A)."""
    B, T, C_in = y.shape
    C_mid = w1.shape[2]
    C_mid2, A = w3.shape
    ypad = jnp.pad(y, ((0, 0), (1, 1 + t_pad - T), (0, 0)))
    w3p = jnp.pad(w3, ((0, 0), (0, a_pad - A)))
    b3p = jnp.pad(b3, ((0, 0), (0, a_pad - A)))
    est = 2 * ((t_pad + 2) * C_in * 4 + 3 * C_in * C_mid * 4 + C_mid * 4
               + C_mid * C_mid2 * 4 + C_mid2 * 4 + C_mid2 * a_pad * 4 + a_pad * 4
               + t_pad * a_pad * 2) + (2 << 20)
    return pl.pallas_call(
        _query_encoder_kernel,
        out_shape=jax.ShapeDtypeStruct((B, t_pad, a_pad), out_dtype),
        grid=(B,),
        in_specs=[
            pl.BlockSpec((1, t_pad + 2, C_in), lambda b: (b, 0, 0)),
            pl.BlockSpec((3, C_in, C_mid), lambda b: (0, 0, 0)),
            pl.BlockSpec((1, C_mid), lambda b: (0, 0)),
            pl.BlockSpec((C_mid, C_mid2), lambda b: (0, 0)),
            pl.BlockSpec((1, C_mid2), lambda b: (0, 0)),
            pl.BlockSpec((C_mid2, a_pad), lambda b: (0, 0)),
            pl.BlockSpec((1, a_pad), lambda b: (0, 0)),
        ],
        out_specs=pl.BlockSpec((1, t_pad, a_pad), lambda b: (b, 0, 0)),
        compiler_params=_compiler_params(est, ("parallel",)),
    )(ypad, w1, b1, w2, b2, w3p, b3p)


# ----------------------------- attention kernel ------------------------------------ #

def _attention_kernel(q_ref, kt_ref, prior_ref, mask_ref, attn_ref, logp_ref,
                      k2_ref, *, temperature, t_en_valid):
    qi = pl.program_id(1)

    # |k|^2 is shared by every T_de tile of this batch element: compute it once at
    # the first q-tile into VMEM scratch (XLU sublane reduce) and reuse it.
    @pl.when(qi == 0)
    def _():
        kf = kt_ref[0].astype(jnp.float32)                      # [A_pad, T_en_pad]
        k2_ref[...] = jnp.sum(kf * kf, axis=0, keepdims=True)   # [1, T_en_pad]

    q = q_ref[0]                                                # [TQ, A_pad] bf16
    qk = jnp.dot(q, kt_ref[0], preferred_element_type=jnp.float32)  # [TQ, T_en_pad]

    # squared L2 distance |q|^2 + |k|^2 - 2 q.k ; the per-row |q|^2 constant is
    # dropped because it cancels exactly under the log_softmax over T_en.
    logits = -temperature * (k2_ref[...] - 2.0 * qk)

    # Exclude the T_en zero-padding columns from the log_softmax denominator
    # (real-but-x_mask'ed keys stay in, matching the torch reference).
    col = lax.broadcasted_iota(jnp.int32, logits.shape, 1)
    logits = jnp.where(col < t_en_valid, logits, -jnp.inf)

    # log_softmax over T_en (dim=3 in the torch code)
    m = jnp.max(logits, axis=-1, keepdims=True)
    lse = m + jnp.log(jnp.sum(jnp.exp(logits - m), axis=-1, keepdims=True))

    # prior arrives in its native [T_en, T_de] layout; transpose the tile in-kernel
    # (XLU) instead of paying a full HBM transpose pass in the wrapper.
    log_prior = jnp.log(jnp.transpose(prior_ref[0]) + 1e-8)     # [TQ, T_en_pad]
    logp = (logits - lse) + log_prior

    logp = jnp.where(mask_ref[0] > 0, logp, -jnp.inf)           # masked_fill_(-inf)
    logp_ref[0] = logp

    # softmax over T_en
    m2 = jnp.max(logp, axis=-1, keepdims=True)
    e = jnp.exp(logp - m2)
    denom = jnp.sum(e, axis=-1, keepdims=True)
    attn_ref[0] = e * pl.reciprocal(denom, approx=True)


def attention(q, kt, prior, x_mask, *, temperature, t_en_valid, tq):
    """q: [B, T_de_pad, A_pad] bf16, kt: [B, A_pad, T_en_pad] bf16,
    prior: [B, T_en_pad, T_de_pad] f32, x_mask: [B, 1, T_en_pad] f32."""
    B, t_de_pad, a_pad = q.shape
    t_en_pad = kt.shape[2]
    nq = t_de_pad // tq
    kern = functools.partial(_attention_kernel, temperature=temperature,
                             t_en_valid=t_en_valid)
    # per-step working set (x2 for double buffering) + scratch
    est = 2 * (tq * a_pad * 2 + a_pad * t_en_pad * 2 + t_en_pad * tq * 4
               + t_en_pad * 4 + 2 * tq * t_en_pad * 4) + t_en_pad * 4 + (2 << 20)
    cost = pl.CostEstimate(
        flops=2 * B * t_de_pad * t_en_pad * a_pad,
        transcendentals=3 * B * t_de_pad * t_en_pad,
        bytes_accessed=B * (t_de_pad * a_pad * 2 + a_pad * t_en_pad * 2
                            + 3 * t_de_pad * t_en_pad * 4 + t_en_pad * 4),
    )
    return pl.pallas_call(
        kern,
        out_shape=(jax.ShapeDtypeStruct((B, t_de_pad, t_en_pad), jnp.float32),
                   jax.ShapeDtypeStruct((B, t_de_pad, t_en_pad), jnp.float32)),
        grid=(B, nq),
        in_specs=[
            pl.BlockSpec((1, tq, a_pad), lambda b, i: (b, i, 0)),
            pl.BlockSpec((1, a_pad, t_en_pad), lambda b, i: (b, 0, 0)),   # resident
            pl.BlockSpec((1, t_en_pad, tq), lambda b, i: (b, 0, i)),
            pl.BlockSpec((1, 1, t_en_pad), lambda b, i: (b, 0, 0)),       # resident
        ],
        out_specs=(pl.BlockSpec((1, tq, t_en_pad), lambda b, i: (b, i, 0)),
                   pl.BlockSpec((1, tq, t_en_pad), lambda b, i: (b, i, 0))),
        scratch_shapes=[pltpu.VMEM((1, t_en_pad), jnp.float32)],
        compiler_params=_compiler_params(est, ("parallel", "arbitrary")),
        cost_estimate=cost,
    )(q, kt, prior, x_mask)


# ----------------------------- maximum_path (MAS) ----------------------------------- #

def maximum_path_jax(value, mask):
    """value, mask: [B, t_x, t_y]; returns hard monotonic alignment path [B, t_x, t_y]."""
    # TODO(synk): MAS is an inherently sequential DP + per-batch data-dependent
    # backtrack; kept in plain JAX (lax.scan) rather than Pallas.
    value = value.astype(jnp.float32)
    mask_f = mask.astype(jnp.float32)
    mask_b = mask_f > 0
    B, t_x, t_y = value.shape
    neg = jnp.float32(-jnp.inf)
    value = value * mask_f
    value_t = jnp.transpose(value, (2, 0, 1))                         # [t_y, B, t_x]

    def fwd(v, xs):
        val_j, j = xs
        v0 = jnp.concatenate([jnp.full((B, 1), neg, jnp.float32), v[:, :-1]], axis=1)
        max_mask = v >= v0
        v_max = jnp.where(max_mask, v, v0)
        idx_mask = jnp.arange(t_x)[None, :] <= j
        v_new = jnp.where(idx_mask, v_max + val_j, neg)
        return v_new, max_mask.astype(jnp.int32)

    _, dirs = lax.scan(fwd, jnp.zeros((B, t_x), jnp.float32),
                       (value_t, jnp.arange(t_y)))
    direction = jnp.transpose(dirs, (1, 2, 0))                        # [B, t_x, t_y]
    direction = jnp.where(mask_b, direction, 1)

    index0 = jnp.sum(mask_b[:, :, 0].astype(jnp.int32), axis=1) - 1   # [B]
    dir_rev = jnp.transpose(direction, (2, 0, 1))[::-1]               # j = t_y-1 .. 0

    def bwd(index, dir_j):
        onehot = (jnp.arange(t_x)[None, :] == index[:, None]).astype(jnp.float32)
        d = jnp.sum(dir_j.astype(jnp.float32) * onehot, axis=1).astype(jnp.int32)
        return index + d - 1, onehot

    _, cols = lax.scan(bwd, index0, dir_rev)                          # [t_y, B, t_x]
    path = jnp.transpose(cols[::-1], (1, 2, 0))                       # [B, t_x, t_y]
    return path * mask_f


# ----------------------------- parameters & forward --------------------------------- #

def init_params(key, in_query_channels, in_key_channels, attn_channels):
    gain_relu = math.sqrt(2.0)

    def xavier(k_, ksize, cin, cout, gain):
        fan_in, fan_out = cin * ksize, cout * ksize
        a = gain * math.sqrt(6.0 / (fan_in + fan_out))
        shape = (ksize, cin, cout) if ksize > 1 else (cin, cout)
        return jax.random.uniform(k_, shape, jnp.float32, -a, a)

    def bias(k_, ksize, cin, cout):
        bound = 1.0 / math.sqrt(cin * ksize)
        return jax.random.uniform(k_, (1, cout), jnp.float32, -bound, bound)

    ks = jax.random.split(key, 10)
    return dict(
        k_w1=xavier(ks[0], 3, in_key_channels, 2 * in_key_channels, gain_relu),
        k_b1=bias(ks[1], 3, in_key_channels, 2 * in_key_channels),
        k_w2=xavier(ks[2], 1, 2 * in_key_channels, attn_channels, 1.0),
        k_b2=bias(ks[3], 1, 2 * in_key_channels, attn_channels),
        q_w1=xavier(ks[4], 3, in_query_channels, 2 * in_query_channels, gain_relu),
        q_b1=bias(ks[5], 3, in_query_channels, 2 * in_query_channels),
        q_w2=xavier(ks[6], 1, 2 * in_query_channels, in_query_channels, 1.0),
        q_b2=bias(ks[7], 1, 2 * in_query_channels, in_query_channels),
        q_w3=xavier(ks[8], 1, in_query_channels, attn_channels, 1.0),
        q_b3=bias(ks[9], 1, in_query_channels, attn_channels),
    )


def alignment_network_forward(params, x, y, x_mask, y_mask, attn_priors,
                              temperature=0.0005):
    """x: [B,T_en,C_en], y: [B,T_de,C_de], x_mask: [B,1,T_en], y_mask: [B,1,T_de],
    attn_priors: [B,T_en,T_de].
    Returns (aligner_logprob [B,1,T_de,T_en], aligner_soft [B,T_de,T_en],
             aligner_mas [B,T_de,T_en], aligner_durations [B,T_en] int32)."""
    x = x.astype(jnp.float32)
    y = y.astype(jnp.float32)
    x_mask = x_mask.astype(jnp.float32)
    y_mask = y_mask.astype(jnp.float32)

    B, T_en, _ = x.shape
    T_de = y.shape[1]
    A = params["k_w2"].shape[1]

    # Lane/sublane friendly padded sizes (exact zero padding, see kernel notes).
    a_pad = _round_up(A, 128)
    t_en_pad = _round_up(T_en, 128)
    t_de_128 = _round_up(T_de, 128)
    # q-tile: 256 rows when it divides evenly, else 128 (less padding waste); at
    # TQ<=256 the attention working set fits every generation's scoped VMEM.
    tq = 256 if t_de_128 % 256 == 0 else 128
    t_de_pad = _round_up(T_de, tq)

    attn_mask = x_mask[:, :, :, None] * y_mask[:, :, None, :]         # [B,1,T_en,T_de]

    key_t = key_encoder(x, params["k_w1"], params["k_b1"],
                        params["k_w2"], params["k_b2"],
                        t_pad=t_en_pad, a_pad=a_pad)                   # [B,A_pad,T_en_pad]
    query_out = query_encoder(y, params["q_w1"], params["q_b1"],
                              params["q_w2"], params["q_b2"],
                              params["q_w3"], params["q_b3"],
                              t_pad=t_de_pad, a_pad=a_pad)             # [B,T_de_pad,A_pad]

    prior_p = jnp.pad(attn_priors.astype(jnp.float32),
                      ((0, 0), (0, t_en_pad - T_en), (0, t_de_pad - T_de)))
    x_mask_p = jnp.pad(x_mask, ((0, 0), (0, 0), (0, t_en_pad - T_en)))

    attn_p, logp_p = attention(query_out, key_t, prior_p, x_mask_p,
                               temperature=temperature, t_en_valid=T_en, tq=tq)

    aligner_soft = attn_p[:, :T_de, :T_en]                             # [B,T_de,T_en]
    aligner_logprob = logp_p[:, :T_de, :T_en][:, None]                 # [B,1,T_de,T_en]

    value = jnp.transpose(aligner_soft, (0, 2, 1))                     # [B,T_en,T_de]
    mas_mask = attn_mask[:, 0]                                         # [B,T_en,T_de]
    mas = maximum_path_jax(value, mas_mask)                            # [B,T_en,T_de]
    aligner_durations = jnp.sum(mas, axis=-1).astype(jnp.int32)        # [B,T_en]
    aligner_mas = jnp.transpose(mas, (0, 2, 1))                        # [B,T_de,T_en]
    return aligner_logprob, aligner_soft, aligner_mas, aligner_durations


# ----------------------------- demo ------------------------------------------------- #

if __name__ == "__main__":
    B, T_en, T_de = 2, 16, 24
    C_en, C_de, A = 4, 6, 8

    root = jax.random.PRNGKey(0)
    kp, kx, ky, kprior = jax.random.split(root, 4)

    params = init_params(kp, in_query_channels=C_de, in_key_channels=C_en,
                         attn_channels=A)

    x = jax.random.normal(kx, (B, T_en, C_en), jnp.float32)            # text-side features
    y = jax.random.normal(ky, (B, T_de, C_de), jnp.float32)            # mel-side features
    x_lens = jnp.array([T_en, 12], jnp.int32)
    y_lens = jnp.array([T_de, 18], jnp.int32)
    x_mask = (jnp.arange(T_en)[None, :] < x_lens[:, None]).astype(jnp.float32)[:, None, :]
    y_mask = (jnp.arange(T_de)[None, :] < y_lens[:, None]).astype(jnp.float32)[:, None, :]
    attn_priors = jax.random.uniform(kprior, (B, T_en, T_de), jnp.float32, 0.01, 1.0)

    outs = alignment_network_forward(params, x, y, x_mask, y_mask, attn_priors)
    outs = jax.block_until_ready(outs)
    logprob, soft, mas, durs = outs

    assert logprob.shape == (B, 1, T_de, T_en)
    assert soft.shape == (B, T_de, T_en)
    assert mas.shape == (B, T_de, T_en)
    assert durs.shape == (B, T_en) and durs.dtype == jnp.int32
    assert bool(jnp.isfinite(soft).all())
    print("KERNEL_OK")
</pallas_src>

<mosaic_0001>
module attributes {stable_mosaic.version = 11 : i64} {
  func.func @_key_encoder_kernel(%arg0: i32, %arg1: memref<1x130x4xf32, #tpu.memory_space<vmem>>, %arg2: memref<3x4x8xf32, #tpu.memory_space<vmem>>, %arg3: memref<1x8xf32, #tpu.memory_space<vmem>>, %arg4: memref<8x128xf32, #tpu.memory_space<vmem>>, %arg5: memref<1x128xf32, #tpu.memory_space<vmem>>, %arg6: memref<1x128x128xbf16, #tpu.memory_space<vmem>>) attributes {dimension_semantics = [#tpu.dimension_semantics<parallel>], iteration_bounds = array<i64: 2>, scalar_prefetch = 0 : i64, scratch_operands = 0 : i64, tpu.core_type = #tpu.core_type<tc>, window_params = [{transform_indices = @transform_0, window_bounds = array<i64: 1, 130, 4>}, {pipeline_mode = #tpu.pipeline_mode<synchronous>, transform_indices = @transform_1, window_bounds = array<i64: 3, 4, 8>}, {pipeline_mode = #tpu.pipeline_mode<synchronous>, transform_indices = @transform_2, window_bounds = array<i64: 1, 8>}, {pipeline_mode = #tpu.pipeline_mode<synchronous>, transform_indices = @transform_3, window_bounds = array<i64: 8, 128>}, {pipeline_mode = #tpu.pipeline_mode<synchronous>, transform_indices = @transform_4, window_bounds = array<i64: 1, 128>}, {transform_indices = @transform_5, window_bounds = array<i64: 1, 128, 128>}]} {
    %c0 = arith.constant 0 : index
    %c0_0 = arith.constant 0 : index
    %c0_1 = arith.constant 0 : index
    %0 = vector.load %arg1[%c0, %c0_0, %c0_1] : memref<1x130x4xf32, #tpu.memory_space<vmem>>, vector<1x130x4xf32>
    %1 = vector.shape_cast %0 : vector<1x130x4xf32> to vector<130x4xf32>
    %2 = vector.extract_strided_slice %1 {offsets = [0, 0], sizes = [128, 4], strides = [1, 1]} : vector<130x4xf32> to vector<128x4xf32>
    %c0_2 = arith.constant 0 : index
    %c0_3 = arith.constant 0 : index
    %c0_4 = arith.constant 0 : index
    %3 = vector.load %arg2[%c0_2, %c0_3, %c0_4] : memref<3x4x8xf32, #tpu.memory_space<vmem>>, vector<1x4x8xf32>
    %4 = vector.shape_cast %3 : vector<1x4x8xf32> to vector<4x8xf32>
    %cst = arith.constant dense<0.000000e+00> : vector<128x8xf32>
    %5 = tpu.matmul %2, %4, %cst {dimension_numbers = #tpu.dot_dimension_numbers<[1], [0], [0], [1], [0, 0, 1, 1], [], []>} : vector<128x4xf32>, vector<4x8xf32>, vector<128x8xf32> -> vector<128x8xf32>
    %6 = vector.extract_strided_slice %1 {offsets = [1, 0], sizes = [128, 4], strides = [1, 1]} : vector<130x4xf32> to vector<128x4xf32>
    %c1 = arith.constant 1 : index
    %c0_5 = arith.constant 0 : index
    %c0_6 = arith.constant 0 : index
    %7 = vector.load %arg2[%c1, %c0_5, %c0_6] : memref<3x4x8xf32, #tpu.memory_space<vmem>>, vector<1x4x8xf32>
    %8 = vector.shape_cast %7 : vector<1x4x8xf32> to vector<4x8xf32>
    %cst_7 = arith.constant dense<0.000000e+00> : vector<128x8xf32>
    %9 = tpu.matmul %6, %8, %cst_7 {dimension_numbers = #tpu.dot_dimension_numbers<[1], [0], [0], [1], [0, 0, 1, 1], [], []>} : vector<128x4xf32>, vector<4x8xf32>, vector<128x8xf32> -> vector<128x8xf32>
    %10 = arith.addf %5, %9 : vector<128x8xf32>
    %11 = vector.extract_strided_slice %1 {offsets = [2, 0], sizes = [128, 4], strides = [1, 1]} : vector<130x4xf32> to vector<128x4xf32>
    %c2 = arith.constant 2 : index
    %c0_8 = arith.constant 0 : index
    %c0_9 = arith.constant 0 : index
    %12 = vector.load %arg2[%c2, %c0_8, %c0_9] : memref<3x4x8xf32, #tpu.memory_space<vmem>>, vector<1x4x8xf32>
    %13 = vector.shape_cast %12 : vector<1x4x8xf32> to vector<4x8xf32>
    %cst_10 = arith.constant dense<0.000000e+00> : vector<128x8xf32>
    %14 = tpu.matmul %11, %13, %cst_10 {dimension_numbers = #tpu.dot_dimension_numbers<[1], [0], [0], [1], [0, 0, 1, 1], [], []>} : vector<128x4xf32>, vector<4x8xf32>, vector<128x8xf32> -> vector<128x8xf32>
    %15 = arith.addf %10, %14 : vector<128x8xf32>
    %c0_11 = arith.constant 0 : index
    %c0_12 = arith.constant 0 : index
    %16 = vector.load %arg3[%c0_11, %c0_12] : memref<1x8xf32, #tpu.memory_space<vmem>>, vector<1x8xf32>
    %17 = vector.broadcast %16 : vector<1x8xf32> to vector<128x8xf32>
    %18 = arith.addf %15, %17 : vector<128x8xf32>
    %cst_13 = arith.constant 0.000000e+00 : f32
    %19 = vector.broadcast %cst_13 : f32 to vector<128x8xf32>
    %20 = arith.maximumf %18, %19 : vector<128x8xf32>
    %c0_14 = arith.constant 0 : index
    %c0_15 = arith.constant 0 : index
    %21 = vector.load %arg4[%c0_14, %c0_15] : memref<8x128xf32, #tpu.memory_space<vmem>>, vector<8x128xf32>
    %cst_16 = arith.constant dense<0.000000e+00> : vector<128x128xf32>
    %22 = tpu.matmul %20, %21, %cst_16 {dimension_numbers = #tpu.dot_dimension_numbers<[1], [0], [0], [1], [0, 0, 1, 1], [], []>} : vector<128x8xf32>, vector<8x128xf32>, vector<128x128xf32> -> vector<128x128xf32>
    %c0_17 = arith.constant 0 : index
    %c0_18 = arith.constant 0 : index
    %23 = vector.load %arg5[%c0_17, %c0_18] : memref<1x128xf32, #tpu.memory_space<vmem>>, vector<1x128xf32>
    %24 = vector.broadcast %23 : vector<1x128xf32> to vector<128x128xf32>
    %25 = arith.addf %22, %24 : vector<128x128xf32>
    %26 = tpu.transpose %25, [1, 0] : vector<128x128xf32> -> vector<128x128xf32>
    %27 = arith.truncf %26 : vector<128x128xf32> to vector<128x128xbf16>
    %c0_19 = arith.constant 0 : index
    %c0_20 = arith.constant 0 : index
    %c0_21 = arith.constant 0 : index
    %28 = vector.load %arg6[%c0_19, %c0_20, %c0_21] : memref<1x128x128xbf16, #tpu.memory_space<vmem>>, vector<1x128x128xbf16>
    %29 = vector.shape_cast %28 : vector<1x128x128xbf16> to vector<128x128xbf16>
    %30 = vector.shape_cast %27 : vector<128x128xbf16> to vector<1x128x128xbf16>
    tpu.vector_store %arg6[%c0_19, %c0_20, %c0_21], %30 {strides = array<i32>} : memref<1x128x128xbf16, #tpu.memory_space<vmem>>, vector<1x128x128xbf16>,
    return
  }
  func.func @transform_0(%arg0: i32) -> (i32, i32, i32) {
    %c0_i32 = arith.constant 0 : i32
    %c0_i32_0 = arith.constant 0 : i32
    %c0_i32_1 = arith.constant 0 : i32
    return %arg0, %c0_i32, %c0_i32_0 : i32, i32, i32
  }
  func.func @transform_1(%arg0: i32) -> (i32, i32, i32) {
    %c0_i32 = arith.constant 0 : i32
    %c0_i32_0 = arith.constant 0 : i32
    %c0_i32_1 = arith.constant 0 : i32
    %c0_i32_2 = arith.constant 0 : i32
    return %c0_i32, %c0_i32_0, %c0_i32_1 : i32, i32, i32
  }
  func.func @transform_2(%arg0: i32) -> (i32, i32) {
    %c0_i32 = arith.constant 0 : i32
    %c0_i32_0 = arith.constant 0 : i32
    %c0_i32_1 = arith.constant 0 : i32
    return %c0_i32, %c0_i32_0 : i32, i32
  }
  func.func @transform_3(%arg0: i32) -> (i32, i32) {
    %c0_i32 = arith.constant 0 : i32
    %c0_i32_0 = arith.constant 0 : i32
    %c0_i32_1 = arith.constant 0 : i32
    return %c0_i32, %c0_i32_0 : i32, i32
  }
  func.func @transform_4(%arg0: i32) -> (i32, i32) {
    %c0_i32 = arith.constant 0 : i32
    %c0_i32_0 = arith.constant 0 : i32
    %c0_i32_1 = arith.constant 0 : i32
    return %c0_i32, %c0_i32_0 : i32, i32
  }
  func.func @transform_5(%arg0: i32) -> (i32, i32, i32) {
    %c0_i32 = arith.constant 0 : i32
    %c0_i32_0 = arith.constant 0 : i32
    %c0_i32_1 = arith.constant 0 : i32
    return %arg0, %c0_i32, %c0_i32_0 : i32, i32, i32
  }
}

</mosaic_0001>

<llo_original>
// kernel: tpu_custom_call.1
$region0: #{tpu_custom_call.1}
  #allocation0 [shape = 'u32[]', space=smem, size = 0x4, offset = 0x4, fixed_abs, tag = 'smem constant byte address 0x4 - core index']
  #allocation1 [shape = 'u32[144,128]{1,0:T(1,128)}', space=vmem, size = 0x12000, scoped, tag = 'internal scratch']
  %s0 = inlined_call_operand.vmem [shape: f32[2,130,4], index: 0, kind: input, shape index: {}]
  %s1 = inlined_call_operand.vmem [shape: f32[3,4,8], index: 1, kind: input, shape index: {}]
  %s2 = inlined_call_operand.vmem [shape: f32[1,8], index: 2, kind: input, shape index: {}]
  %s3 = inlined_call_operand.vmem [shape: f32[8,128], index: 3, kind: input, shape index: {}]
  %s4 = inlined_call_operand.vmem [shape: f32[1,128], index: 4, kind: input, shape index: {}]
  %s5 = inlined_call_operand.hbm [shape: bf16[2,128,128], index: 5, kind: output, shape index: {}]
  %s6 = sld [smem:[#allocation0]]
  $region53: #{tpu_custom_call.1} parent=0
    _
  %s8 = ssub.s32 1, %s6
  %s9 = scalar_select 0, %s8, %s6
  $region1: #{tpu_custom_call.1} parent=0
    #allocation2 [shape = 'u8[65536]{0}', space=vmem, size = 0x10000, scoped, tag = 'output window, operand 0']
    #allocation3 [shape = 's32[2]{0}', space=sflag, size = 0x8, scoped, tag = 'scoped memory for tpu_custom_call.1']
    %10 = vsyncpa [#allocation3], 0
    %s11 = scalar_lea.sflag [#allocation3], 1
    %12 = vsyncpa %s11, 0
    loop: start=0, step=1, limit=4
    $region2: #{tpu_custom_call.1} parent=1 // loop_pre_header
      _
    $region3: #{tpu_custom_call.1} parent=1 // loop_header
      %s14 = sphi 0, %s18
      %p15 = scmp.ge.s32.totalorder %s14, 4
      %s24 = sphi 0, %s26
      %s27 = sphi 0, %s24
      %s28 = sphi 0, %s27
      %s44 = sphi 0, %s28
      %s48 = sphi 0, %s48
      %s50 = sphi 0, %s48
      %s51 = sphi 0, %s50
      %s65 = sphi 0, %s51
      %s69 = sphi 0, %s69
      %s71 = sphi 0, %s69
      %s72 = sphi 0, %s71
      %s86 = sphi 0, %s72
      %s90 = sphi 0, %s90
      %s92 = sphi 0, %s90
      %s93 = sphi 0, %s92
      %s107 = sphi 0, %s93
      %s111 = sphi 0, %s111
      %s113 = sphi 0, %s111
      %s114 = sphi 0, %s113
      %s128 = sphi 0, %s114
      %s134 = sphi 0, %s136
      %s137 = sphi 0, %s134
      %s138 = sphi 0, %s137
      %s154 = sphi 0, %s138
    $region4: #{tpu_custom_call.1} parent=1 // loop_header_branch
      %17 = sbr.rel (%p15) target = $region8
    $region5: #{tpu_custom_call.1} parent=1 // loop_body
      %s19 = ssub.s32 %s14, 1
      %s20 = ssub.s32 %s14, 2
      %s21 = sadd.s32 %s14, 1
      %s22 = ssub.s32 %s14, %s21
      %p23 = scmp.eq.s32.totalorder %s22, 0
      %s25 = sadd.s32 %s24, 1
      %s26 = scalar_select %p23, %s24, %s25
      %p29 = pneg %p23
      %p30 = scmp.eq.s32.totalorder %s14, 1
      %p31 = por %p29, %p30
      %p32 = scmp.ne.s32.totalorder %s24, %s27
      %p33 = scmp.eq.s32.totalorder %s14, 0
      %p34 = por %p32, %p33
      %p35 = scmp.ne.s32.totalorder %s24, %s27
      %p36 = scmp.eq.s32.totalorder %s19, 1
      %p37 = por %p35, %p36
      %p38 = scmp.ne.s32.totalorder %s27, %s28
      %p39 = scmp.eq.s32.totalorder %s19, 0
      %p40 = por %p38, %p39
      %p41 = scmp.ne.s32.totalorder %s27, %s28
      %p42 = scmp.eq.s32.totalorder %s20, 1
      %p43 = por %p41, %p42
      %p45 = scmp.ne.s32.totalorder %s28, %s44
      %p46 = scmp.eq.s32.totalorder %s20, 0
      %p47 = por %p45, %p46
      %s49 = sadd.s32 %s48, 1
      %p52 = scmp.eq.s32.totalorder %s14, 1
      %p53 = scmp.ne.s32.totalorder %s48, %s50
      %p54 = scmp.eq.s32.totalorder %s14, 0
      %p55 = por %p53, %p54
      %p56 = scmp.ne.s32.totalorder %s48, %s50
      %p57 = scmp.eq.s32.totalorder %s19, 1
      %p58 = por %p56, %p57
      %p59 = scmp.ne.s32.totalorder %s50, %s51
      %p60 = scmp.eq.s32.totalorder %s19, 0
      %p61 = por %p59, %p60
      %p62 = scmp.ne.s32.totalorder %s50, %s51
      %p63 = scmp.eq.s32.totalorder %s20, 1
      %p64 = por %p62, %p63
      %p66 = scmp.ne.s32.totalorder %s51, %s65
      %p67 = scmp.eq.s32.totalorder %s20, 0
      %p68 = por %p66, %p67
      %s70 = sadd.s32 %s69, 1
      %p73 = scmp.eq.s32.totalorder %s14, 1
      %p74 = scmp.ne.s32.totalorder %s69, %s71
      %p75 = scmp.eq.s32.totalorder %s14, 0
      %p76 = por %p74, %p75
      %p77 = scmp.ne.s32.totalorder %s69, %s71
      %p78 = scmp.eq.s32.totalorder %s19, 1
      %p79 = por %p77, %p78
      %p80 = scmp.ne.s32.totalorder %s71, %s72
      %p81 = scmp.eq.s32.totalorder %s19, 0
      %p82 = por %p80, %p81
      %p83 = scmp.ne.s32.totalorder %s71, %s72
      %p84 = scmp.eq.s32.totalorder %s20, 1
      %p85 = por %p83, %p84
      %p87 = scmp.ne.s32.totalorder %s72, %s86
      %p88 = scmp.eq.s32.totalorder %s20, 0
      %p89 = por %p87, %p88
      %s91 = sadd.s32 %s90, 1
      %p94 = scmp.eq.s32.totalorder %s14, 1
      %p95 = scmp.ne.s32.totalorder %s90, %s92
      %p96 = scmp.eq.s32.totalorder %s14, 0
      %p97 = por %p95, %p96
      %p98 = scmp.ne.s32.totalorder %s90, %s92
      %p99 = scmp.eq.s32.totalorder %s19, 1
      %p100 = por %p98, %p99
      %p101 = scmp.ne.s32.totalorder %s92, %s93
      %p102 = scmp.eq.s32.totalorder %s19, 0
      %p103 = por %p101, %p102
      %p104 = scmp.ne.s32.totalorder %s92, %s93
      %p105 = scmp.eq.s32.totalorder %s20, 1
      %p106 = por %p104, %p105
      %p108 = scmp.ne.s32.totalorder %s93, %s107
      %p109 = scmp.eq.s32.totalorder %s20, 0
      %p110 = por %p108, %p109
      %s112 = sadd.s32 %s111, 1
      %p115 = scmp.eq.s32.totalorder %s14, 1
      %p116 = scmp.ne.s32.totalorder %s111, %s113
      %p117 = scmp.eq.s32.totalorder %s14, 0
      %p118 = por %p116, %p117
      %p119 = scmp.ne.s32.totalorder %s111, %s113
      %p120 = scmp.eq.s32.totalorder %s19, 1
      %p121 = por %p119, %p120
      %p122 = scmp.ne.s32.totalorder %s113, %s114
      %p123 = scmp.eq.s32.totalorder %s19, 0
      %p124 = por %p122, %p123
      %p125 = scmp.ne.s32.totalorder %s113, %s114
      %p126 = scmp.eq.s32.totalorder %s20, 1
      %p127 = por %p125, %p126
      %p129 = scmp.ne.s32.totalorder %s114, %s128
      %p130 = scmp.eq.s32.totalorder %s20, 0
      %p131 = por %p129, %p130
      %s132 = ssub.s32 %s14, %s21
      %p133 = scmp.eq.s32.totalorder %s132, 0
      %s135 = sadd.s32 %s134, 1
      %s136 = scalar_select %p133, %s134, %s135
      %p139 = pneg %p133
      %p140 = scmp.eq.s32.totalorder %s14, 1
      %p141 = por %p139, %p140
      %p142 = scmp.ne.s32.totalorder %s134, %s137
      %p143 = scmp.eq.s32.totalorder %s14, 0
      %p144 = por %p142, %p143
      %p145 = scmp.ne.s32.totalorder %s134, %s137
      %p146 = scmp.eq.s32.totalorder %s19, 1
      %p147 = por %p145, %p146
      %p148 = scmp.ne.s32.totalorder %s137, %s138
      %p149 = scmp.eq.s32.totalorder %s19, 0
      %p150 = por %p148, %p149
      %p151 = scmp.ne.s32.totalorder %s137, %s138
      %p152 = scmp.eq.s32.totalorder %s20, 1
      %p153 = por %p151, %p152
      %p155 = scmp.ne.s32.totalorder %s138, %s154
      %p156 = scmp.eq.s32.totalorder %s20, 0
      %p157 = por %p155, %p156
      %p158 = scmp.le.s32.totalorder 1, %s14
      %p159 = scmp.lt.s32.totalorder %s14, 3
      %p160 = pnand %p158, %p159
      %p161 = pneg %p160
      // Predicated region
      $region9: #{tpu_custom_call.1} parent=5 // pred_check
        _
      $region10: #{tpu_custom_call.1} parent=5 // pred_check_branch
        %163 = sbr.rel (%p160) target = $region12
      $region11: #{tpu_custom_call.1} parent=5 // pred_region
        %s164 = ssub.s32 %s14, 1
        // Predicated region
        $region13: #{tpu_custom_call.1} parent=11 // pred_check
          %p165 = pneg %p61
        $region14: #{tpu_custom_call.1} parent=11 // pred_check_branch
          %167 = sbr.rel (%p165) target = $region16
        $region15: #{tpu_custom_call.1} parent=11 // pred_region
          _
        $region16: #{tpu_custom_call.1} parent=11 // pred_fallthru
          _
        // Predicated region
        $region17: #{tpu_custom_call.1} parent=11 // pred_check
          %p168 = pneg %p82
        $region18: #{tpu_custom_call.1} parent=11 // pred_check_branch
          %170 = sbr.rel (%p168) target = $region20
        $region19: #{tpu_custom_call.1} parent=11 // pred_region
          _
        $region20: #{tpu_custom_call.1} parent=11 // pred_fallthru
          _
        // Predicated region
        $region21: #{tpu_custom_call.1} parent=11 // pred_check
          %p171 = pneg %p103
        $region22: #{tpu_custom_call.1} parent=11 // pred_check_branch
          %173 = sbr.rel (%p171) target = $region24
        $region23: #{tpu_custom_call.1} parent=11 // pred_region
          _
        $region24: #{tpu_custom_call.1} parent=11 // pred_fallthru
          _
        // Predicated region
        $region25: #{tpu_custom_call.1} parent=11 // pred_check
          %p174 = pneg %p124
        $region26: #{tpu_custom_call.1} parent=11 // pred_check_branch
          %176 = sbr.rel (%p174) target = $region28
        $region27: #{tpu_custom_call.1} parent=11 // pred_region
          _
        $region28: #{tpu_custom_call.1} parent=11 // pred_fallthru
          _
      $region12: #{tpu_custom_call.1} parent=5 // pred_fallthru
        _
      %p177 = scmp.lt.s32.totalorder %s14, 2
      // Predicated region
      $region29: #{tpu_custom_call.1} parent=5 // pred_check
        %p178 = pneg %p177
      $region30: #{tpu_custom_call.1} parent=5 // pred_check_branch
        %180 = sbr.rel (%p178) target = $region32
      $region31: #{tpu_custom_call.1} parent=5 // pred_region
        // Predicated region
        $region33: #{tpu_custom_call.1} parent=31 // pred_check
          %p181 = pneg %p34
        $region34: #{tpu_custom_call.1} parent=31 // pred_check_branch
          %183 = sbr.rel (%p181) target = $region36
        $region35: #{tpu_custom_call.1} parent=31 // pred_region
          %p184 = scmp.lt.s32.totalorder %s14, 1
          %s185 = scalar_select %p184, %s14, 1
          %s186 = smul.addr %s185, 17
          %s187 = smul.addr %s186, 8
          %s188 = scalar_lea.vmem %s0, %s187
        $region36: #{tpu_custom_call.1} parent=31 // pred_fallthru
          _
      $region32: #{tpu_custom_call.1} parent=5 // pred_fallthru
        _
      %p189 = scmp.le.s32.totalorder 1, %s14
      %p190 = scmp.lt.s32.totalorder %s14, 3
      %p191 = pnand %p189, %p190
      %p192 = pneg %p191
      // Predicated region
      $region37: #{tpu_custom_call.1} parent=5 // pred_check
        _
      $region38: #{tpu_custom_call.1} parent=5 // pred_check_branch
        %194 = sbr.rel (%p191) target = $region40
      $region39: #{tpu_custom_call.1} parent=5 // pred_region
        %s195 = ssub.s32 %s14, 1
        %p196 = scmp.lt.s32.totalorder %s19, 1
        %s197 = scalar_select %p196, %s19, 1
        %s198 = smul.addr %s197, 17
        %s199 = smul.addr %s198, 8
        %s200 = scalar_lea.vmem %s0, %s199
        %p201 = pneg %p40
        %p202 = pneg %p37
        %p203 = pneg %p61
        %p204 = pneg %p58
        %p205 = pneg %p82
        %p206 = pneg %p79
        %p207 = pneg %p103
        %p208 = pneg %p100
        %p209 = pneg %p124
        %p210 = pneg %p121
        %p211 = pneg %p150
        %p212 = pneg %p147
        %s213 = sand.u32 %s137, 1
        %s214 = scalar_lea.sflag [#allocation3], %s213
        %s215 = sand.u32 %s137, 1
        %s216 = smul.addr %s215, 64
        %s217 = scalar_lea.vmem [#allocation2], %s216
        %p218 = scmp.lt.s32.totalorder %s19, 1
        %s219 = scalar_select %p218, %s19, 1
        %s220 = smul.addr %s219, 17
        %s221 = smul.addr %s220, 8
        %s222 = scalar_lea.vmem %s0, %s221
        %v223 = vld [vmem:[%s222] sm:$0xff]
        %v224 = vld [vmem:[%s222 + $0x8] sm:$0xff]
        %v225 = vld [vmem:[%s222 + $0x10] sm:$0xff]
        %v226 = vld [vmem:[%s222 + $0x18] sm:$0xff]
        %v227 = vld [vmem:[%s222 + $0x20] sm:$0xff]
        %v228 = vld [vmem:[%s222 + $0x28] sm:$0xff]
        %v229 = vld [vmem:[%s222 + $0x30] sm:$0xff]
        %v230 = vld [vmem:[%s222 + $0x38] sm:$0xff]
        %v231 = vld [vmem:[%s222 + $0x40] sm:$0xff]
        %v232 = vld [vmem:[%s222 + $0x48] sm:$0xff]
        %v233 = vld [vmem:[%s222 + $0x50] sm:$0xff]
        %v234 = vld [vmem:[%s222 + $0x58] sm:$0xff]
        %v235 = vld [vmem:[%s222 + $0x60] sm:$0xff]
        %v236 = vld [vmem:[%s222 + $0x68] sm:$0xff]
        %v237 = vld [vmem:[%s222 + $0x70] sm:$0xff]
        %v238 = vld [vmem:[%s222 + $0x78] sm:$0xff]
        %v239 = vld [vmem:[%s222 + $0x80] sm:$0x3]
        %v240 = vld [vmem:[%s1] sm:$0xf]
        %s241 = scalar_lea.vmem %s1, 4
        %v242 = vld [vmem:[%s241] sm:$0xf]
        %vm260 = vcmask 1046528
        %v261 = vrot.slane %v223, 1
        %v262 = vrot.slane %v224, 1
        %v263 = vsel %vm260, %v261, %v262
        %v264 = vrot.slane %v225, 1
        %v265 = vsel %vm260, %v262, %v264
        %v266 = vrot.slane %v226, 1
        %v267 = vsel %vm260, %v264, %v266
        %v268 = vrot.slane %v227, 1
        %v269 = vsel %vm260, %v266, %v268
        %v270 = vrot.slane %v228, 1
        %v271 = vsel %vm260, %v268, %v270
        %v272 = vrot.slane %v229, 1
        %v273 = vsel %vm260, %v270, %v272
        %v274 = vrot.slane %v230, 1
        %v275 = vsel %vm260, %v272, %v274
        %v276 = vrot.slane %v231, 1
        %v277 = vsel %vm260, %v274, %v276
        %v278 = vrot.slane %v232, 1
        %v279 = vsel %vm260, %v276, %v278
        %v280 = vrot.slane %v233, 1
        %v281 = vsel %vm260, %v278, %v280
        %v282 = vrot.slane %v234, 1
        %v283 = vsel %vm260, %v280, %v282
        %v284 = vrot.slane %v235, 1
        %v285 = vsel %vm260, %v282, %v284
        %v286 = vrot.slane %v236, 1
        %v287 = vsel %vm260, %v284, %v286
        %v288 = vrot.slane %v237, 1
        %v289 = vsel %vm260, %v286, %v288
        %v290 = vrot.slane %v238, 1
        %v291 = vsel %vm260, %v288, %v290
        %v292 = vrot.slane %v239, 1
        %v293 = vsel %vm260, %v290, %v292
        %vm294 = vcmask 31744
        %v295 = vsel %vm294, %v263, 0
        %v297 = vsel %vm294, %v265, 0
        %v299 = vsel %vm294, %v267, 0
        %v301 = vsel %vm294, %v269, 0
        %v303 = vsel %vm294, %v271, 0
        %v305 = vsel %vm294, %v273, 0
        %v307 = vsel %vm294, %v275, 0
        %v309 = vsel %vm294, %v277, 0
        %v311 = vsel %vm294, %v279, 0
        %v313 = vsel %vm294, %v281, 0
        %v315 = vsel %vm294, %v283, 0
        %v317 = vsel %vm294, %v285, 0
        %v319 = vsel %vm294, %v287, 0
        %v321 = vsel %vm294, %v289, 0
        %v323 = vsel %vm294, %v291, 0
        %v325 = vsel %vm294, %v293, 0
        %vm327 = vcmask 1043456
        %v329 = vsel %vm327, %v242, 0
        %331 = vmatprep.subr.mxu0 0.0
        %332 = vmatpush1.msra.mxu0 %v329
        %333 = vmatprep.subr.mxu0 0.0
        %334 = vmatpush1.msra.mxu0 0.0
        %335 = vmatprep.subr.mxu0 0.0
        %336 = vmatpush1.msra.mxu0 0.0
        %337 = vmatprep.subr.mxu0 0.0
        %338 = vmatpush1.msra.mxu0 0.0
        %339 = vmatprep.subr.mxu0 0.0
        %340 = vmatpush1.msra.mxu0 0.0
        %341 = vmatprep.subr.mxu0 0.0
        %342 = vmatpush1.msra.mxu0 0.0
        %343 = vmatprep.subr.mxu0 0.0
        %344 = vmatpush1.msra.mxu0 0.0
        %345 = vmatprep.subr.mxu0 0.0
        %346 = vmatpush1.msra.mxu0 0.0
        %347 = vmatprep.subr.mxu0 0.0
        %348 = vmatpush1.msra.mxu0 0.0
        %349 = vmatprep.subr.mxu0 0.0
        %350 = vmatpush1.msra.mxu0 0.0
        %351 = vmatprep.subr.mxu0 0.0
        %352 = vmatpush1.msra.mxu0 0.0
        %353 = vmatprep.subr.mxu0 0.0
        %354 = vmatpush1.msra.mxu0 0.0
        %355 = vmatprep.subr.mxu0 0.0
        %356 = vmatpush1.msra.mxu0 0.0
        %357 = vmatprep.subr.mxu0 0.0
        %358 = vmatpush1.msra.mxu0 0.0
        %359 = vmatprep.subr.mxu0 0.0
        %360 = vmatpush1.msra.mxu0 0.0
        %361 = vmatprep.subr.mxu0 0.0
        %362 = vmatpush1.msra.mxu0 0.0
        %363 = vmatprep.subr.mxu0 0.0
        %364 = vmatpush1.msra.mxu0 0.0
        %365 = vmatprep.subr.mxu0 0.0
        %366 = vmatpush1.msra.mxu0 0.0
        %367 = vmatprep.subr.mxu0 0.0
        %368 = vmatpush1.msra.mxu0 0.0
        %369 = vmatprep.subr.mxu0 0.0
        %370 = vmatpush1.msra.mxu0 0.0
        %371 = vmatprep.subr.mxu0 0.0
        %372 = vmatpush1.msra.mxu0 0.0
        %373 = vmatprep.subr.mxu0 0.0
        %374 = vmatpush1.msra.mxu0 0.0
        %375 = vmatprep.subr.mxu0 0.0
        %376 = vmatpush1.msra.mxu0 0.0
        %377 = vmatprep.subr.mxu0 0.0
        %378 = vmatpush1.msra.mxu0 0.0
        %379 = vmatprep.subr.mxu0 0.0
        %380 = vmatpush1.msra.mxu0 0.0
        %381 = vmatprep.subr.mxu0 0.0
        %382 = vmatpush1.msra.mxu0 0.0
        %383 = vmatprep.subr.mxu0 0.0
        %384 = vmatpush1.msra.mxu0 0.0
        %385 = vmatprep.subr.mxu0 0.0
        %386 = vmatpush1.msra.mxu0 0.0
        %387 = vmatprep.subr.mxu0 0.0
        %388 = vmatpush1.msra.mxu0 0.0
        %389 = vmatprep.subr.mxu0 0.0
        %390 = vmatpush1.msra.mxu0 0.0
        %391 = vmatprep.subr.mxu0 0.0
        %392 = vmatpush1.msra.mxu0 0.0
        %393 = vmatprep.subr.mxu0 0.0
        %394 = vmatpush1.msra.mxu0 0.0
        %395 = vmatprep.mubr.f32.mxu0 0.0
        %396 = vmatmul.mubr.f32.gmra.mrb[0].mxu0 %v295
        %v397 = vpop.f32.mrb[0].mxu0
        %v398 = vadd.f32 0.0, %v397
        %v399 = vpop.f32.mrb[0].mxu0
        %400 = vmatprep.mubr.f32.mxu0 0.0
        %401 = vmatmul.mubr.f32.gmra.mrb[0].mxu0 %v297
        %v402 = vpop.f32.mrb[0].mxu0
        %v403 = vadd.f32 0.0, %v402
        %v404 = vpop.f32.mrb[0].mxu0
        %405 = vmatprep.mubr.f32.mxu0 0.0
        %406 = vmatmul.mubr.f32.gmra.mrb[0].mxu0 %v299
        %v407 = vpop.f32.mrb[0].mxu0
        %v408 = vadd.f32 0.0, %v407
        %v409 = vpop.f32.mrb[0].mxu0
        %410 = vmatprep.mubr.f32.mxu0 0.0
        %411 = vmatmul.mubr.f32.gmra.mrb[0].mxu0 %v301
        %v412 = vpop.f32.mrb[0].mxu0
        %v413 = vadd.f32 0.0, %v412
        %v414 = vpop.f32.mrb[0].mxu0
        %415 = vmatprep.mubr.f32.mxu0 0.0
        %416 = vmatmul.mubr.f32.gmra.mrb[0].mxu0 %v303
        %v417 = vpop.f32.mrb[0].mxu0
        %v418 = vadd.f32 0.0, %v417
        %v419 = vpop.f32.mrb[0].mxu0
        %420 = vmatprep.mubr.f32.mxu0 0.0
        %421 = vmatmul.mubr.f32.gmra.mrb[0].mxu0 %v305
        %v422 = vpop.f32.mrb[0].mxu0
        %v423 = vadd.f32 0.0, %v422
        %v424 = vpop.f32.mrb[0].mxu0
        %425 = vmatprep.mubr.f32.mxu0 0.0
        %426 = vmatmul.mubr.f32.gmra.mrb[0].mxu0 %v307
        %v427 = vpop.f32.mrb[0].mxu0
        %v428 = vadd.f32 0.0, %v427
        %v429 = vpop.f32.mrb[0].mxu0
        %430 = vmatprep.mubr.f32.mxu0 0.0
        %431 = vmatmul.mubr.f32.gmra.mrb[0].mxu0 %v309
        %v432 = vpop.f32.mrb[0].mxu0
        %v433 = vadd.f32 0.0, %v432
        %v434 = vpop.f32.mrb[0].mxu0
        %435 = vmatprep.mubr.f32.mxu0 0.0
        %436 = vmatmul.mubr.f32.gmra.mrb[0].mxu0 %v311
        %v437 = vpop.f32.mrb[0].mxu0
        %v438 = vadd.f32 0.0, %v437
        %v439 = vpop.f32.mrb[0].mxu0
        %440 = vmatprep.mubr.f32.mxu0 0.0
        %441 = vmatmul.mubr.f32.gmra.mrb[0].mxu0 %v313
        %v442 = vpop.f32.mrb[0].mxu0
        %v443 = vadd.f32 0.0, %v442
        %v444 = vpop.f32.mrb[0].mxu0
        %445 = vmatprep.mubr.f32.mxu0 0.0
        %446 = vmatmul.mubr.f32.gmra.mrb[0].mxu0 %v315
        %v447 = vpop.f32.mrb[0].mxu0
        %v448 = vadd.f32 0.0, %v447
        %v449 = vpop.f32.mrb[0].mxu0
        %450 = vmatprep.mubr.f32.mxu0 0.0
        %451 = vmatmul.mubr.f32.gmra.mrb[0].mxu0 %v317
        %v452 = vpop.f32.mrb[0].mxu0
        %v453 = vadd.f32 0.0, %v452
        %v454 = vpop.f32.mrb[0].mxu0
        %455 = vmatprep.mubr.f32.mxu0 0.0
        %456 = vmatmul.mubr.f32.gmra.mrb[0].mxu0 %v319
        %v457 = vpop.f32.mrb[0].mxu0
        %v458 = vadd.f32 0.0, %v457
        %v459 = vpop.f32.mrb[0].mxu0
        %460 = vmatprep.mubr.f32.mxu0 0.0
        %461 = vmatmul.mubr.f32.gmra.mrb[0].mxu0 %v321
        %v462 = vpop.f32.mrb[0].mxu0
        %v463 = vadd.f32 0.0, %v462
        %v464 = vpop.f32.mrb[0].mxu0
        %465 = vmatprep.mubr.f32.mxu0 0.0
        %466 = vmatmul.mubr.f32.gmra.mrb[0].mxu0 %v323
        %v467 = vpop.f32.mrb[0].mxu0
        %v468 = vadd.f32 0.0, %v467
        %v469 = vpop.f32.mrb[0].mxu0
        %470 = vmatprep.mubr.f32.mxu0 0.0
        %471 = vmatmul.mubr.f32.gmra.mrb[0].mxu0 %v325
        %v472 = vpop.f32.mrb[0].mxu0
        %v473 = vadd.f32 0.0, %v472
        %v474 = vpop.f32.mrb[0].mxu0
        %475 = vdwg.mxu0
        %v476 = vsel %vm294, %v223, 0
        %v478 = vsel %vm294, %v224, 0
        %v480 = vsel %vm294, %v225, 0
        %v482 = vsel %vm294, %v226, 0
        %v484 = vsel %vm294, %v227, 0
        %v486 = vsel %vm294, %v228, 0
        %v488 = vsel %vm294, %v229, 0
        %v490 = vsel %vm294, %v230, 0
        %v492 = vsel %vm294, %v231, 0
        %v494 = vsel %vm294, %v232, 0
        %v496 = vsel %vm294, %v233, 0
        %v498 = vsel %vm294, %v234, 0
        %v500 = vsel %vm294, %v235, 0
        %v502 = vsel %vm294, %v236, 0
        %v504 = vsel %vm294, %v237, 0
        %v506 = vsel %vm294, %v238, 0
        %v509 = vsel %vm327, %v240, 0
        %511 = vmatprep.subr.mxu0 0.0
        %512 = vmatpush1.msra.mxu0 %v509
        %513 = vmatprep.subr.mxu0 0.0
        %514 = vmatpush1.msra.mxu0 0.0
        %515 = vmatprep.subr.mxu0 0.0
        %516 = vmatpush1.msra.mxu0 0.0
        %517 = vmatprep.subr.mxu0 0.0
        %518 = vmatpush1.msra.mxu0 0.0
        %519 = vmatprep.subr.mxu0 0.0
        %520 = vmatpush1.msra.mxu0 0.0
        %521 = vmatprep.subr.mxu0 0.0
        %522 = vmatpush1.msra.mxu0 0.0
        %523 = vmatprep.subr.mxu0 0.0
        %524 = vmatpush1.msra.mxu0 0.0
        %525 = vmatprep.subr.mxu0 0.0
        %526 = vmatpush1.msra.mxu0 0.0
        %527 = vmatprep.subr.mxu0 0.0
        %528 = vmatpush1.msra.mxu0 0.0
        %529 = vmatprep.subr.mxu0 0.0
        %530 = vmatpush1.msra.mxu0 0.0
        %531 = vmatprep.subr.mxu0 0.0
        %532 = vmatpush1.msra.mxu0 0.0
        %533 = vmatprep.subr.mxu0 0.0
        %534 = vmatpush1.msra.mxu0 0.0
        %535 = vmatprep.subr.mxu0 0.0
        %536 = vmatpush1.msra.mxu0 0.0
        %537 = vmatprep.subr.mxu0 0.0
        %538 = vmatpush1.msra.mxu0 0.0
        %539 = vmatprep.subr.mxu0 0.0
        %540 = vmatpush1.msra.mxu0 0.0
        %541 = vmatprep.subr.mxu0 0.0
        %542 = vmatpush1.msra.mxu0 0.0
        %543 = vmatprep.subr.mxu0 0.0
        %544 = vmatpush1.msra.mxu0 0.0
        %545 = vmatprep.subr.mxu0 0.0
        %546 = vmatpush1.msra.mxu0 0.0
        %547 = vmatprep.subr.mxu0 0.0
        %548 = vmatpush1.msra.mxu0 0.0
        %549 = vmatprep.subr.mxu0 0.0
        %550 = vmatpush1.msra.mxu0 0.0
        %551 = vmatprep.subr.mxu0 0.0
        %552 = vmatpush1.msra.mxu0 0.0
        %553 = vmatprep.subr.mxu0 0.0
        %554 = vmatpush1.msra.mxu0 0.0
        %555 = vmatprep.subr.mxu0 0.0
        %556 = vmatpush1.msra.mxu0 0.0
        %557 = vmatprep.subr.mxu0 0.0
        %558 = vmatpush1.msra.mxu0 0.0
        %559 = vmatprep.subr.mxu0 0.0
        %560 = vmatpush1.msra.mxu0 0.0
        %561 = vmatprep.subr.mxu0 0.0
        %562 = vmatpush1.msra.mxu0 0.0
        %563 = vmatprep.subr.mxu0 0.0
        %564 = vmatpush1.msra.mxu0 0.0
        %565 = vmatprep.subr.mxu0 0.0
        %566 = vmatpush1.msra.mxu0 0.0
        %567 = vmatprep.subr.mxu0 0.0
        %568 = vmatpush1.msra.mxu0 0.0
        %569 = vmatprep.subr.mxu0 0.0
        %570 = vmatpush1.msra.mxu0 0.0
        %571 = vmatprep.subr.mxu0 0.0
        %572 = vmatpush1.msra.mxu0 0.0
        %573 = vmatprep.subr.mxu0 0.0
        %574 = vmatpush1.msra.mxu0 0.0
        %575 = vmatprep.mubr.f32.mxu0 0.0
        %576 = vmatmul.mubr.f32.gmra.mrb[0].mxu0 %v476
        %v577 = vpop.f32.mrb[0].mxu0
        %v578 = vadd.f32 %v398, %v577
        %v579 = vpop.f32.mrb[0].mxu0
        %580 = vmatprep.mubr.f32.mxu0 0.0
        %581 = vmatmul.mubr.f32.gmra.mrb[0].mxu0 %v478
        %v582 = vpop.f32.mrb[0].mxu0
        %v583 = vadd.f32 %v403, %v582
        %v584 = vpop.f32.mrb[0].mxu0
        %585 = vmatprep.mubr.f32.mxu0 0.0
        %586 = vmatmul.mubr.f32.gmra.mrb[0].mxu0 %v480
        %v587 = vpop.f32.mrb[0].mxu0
        %v588 = vadd.f32 %v408, %v587
        %v589 = vpop.f32.mrb[0].mxu0
        %590 = vmatprep.mubr.f32.mxu0 0.0
        %591 = vmatmul.mubr.f32.gmra.mrb[0].mxu0 %v482
        %v592 = vpop.f32.mrb[0].mxu0
        %v593 = vadd.f32 %v413, %v592
        %v594 = vpop.f32.mrb[0].mxu0
        %595 = vmatprep.mubr.f32.mxu0 0.0
        %596 = vmatmul.mubr.f32.gmra.mrb[0].mxu0 %v484
        %v597 = vpop.f32.mrb[0].mxu0
        %v598 = vadd.f32 %v418, %v597
        %v599 = vpop.f32.mrb[0].mxu0
        %600 = vmatprep.mubr.f32.mxu0 0.0
        %601 = vmatmul.mubr.f32.gmra.mrb[0].mxu0 %v486
        %v602 = vpop.f32.mrb[0].mxu0
        %v603 = vadd.f32 %v423, %v602
        %v604 = vpop.f32.mrb[0].mxu0
        %605 = vmatprep.mubr.f32.mxu0 0.0
        %606 = vmatmul.mubr.f32.gmra.mrb[0].mxu0 %v488
        %v607 = vpop.f32.mrb[0].mxu0
        %v608 = vadd.f32 %v428, %v607
        %v609 = vpop.f32.mrb[0].mxu0
        %610 = vmatprep.mubr.f32.mxu0 0.0
        %611 = vmatmul.mubr.f32.gmra.mrb[0].mxu0 %v490
        %v612 = vpop.f32.mrb[0].mxu0
        %v613 = vadd.f32 %v433, %v612
        %v614 = vpop.f32.mrb[0].mxu0
        %615 = vmatprep.mubr.f32.mxu0 0.0
        %616 = vmatmul.mubr.f32.gmra.mrb[0].mxu0 %v492
        %v617 = vpop.f32.mrb[0].mxu0
        %v618 = vadd.f32 %v438, %v617
        %v619 = vpop.f32.mrb[0].mxu0
        %620 = vmatprep.mubr.f32.mxu0 0.0
        %621 = vmatmul.mubr.f32.gmra.mrb[0].mxu0 %v494
        %v622 = vpop.f32.mrb[0].mxu0
        %v623 = vadd.f32 %v443, %v622
        %v624 = vpop.f32.mrb[0].mxu0
        %625 = vmatprep.mubr.f32.mxu0 0.0
        %626 = vmatmul.mubr.f32.gmra.mrb[0].mxu0 %v496
        %v627 = vpop.f32.mrb[0].mxu0
        %v628 = vadd.f32 %v448, %v627
        %v629 = vpop.f32.mrb[0].mxu0
        %630 = vmatprep.mubr.f32.mxu0 0.0
        %631 = vmatmul.mubr.f32.gmra.mrb[0].mxu0 %v498
        %v632 = vpop.f32.mrb[0].mxu0
        %v633 = vadd.f32 %v453, %v632
        %v634 = vpop.f32.mrb[0].mxu0
        %635 = vmatprep.mubr.f32.mxu0 0.0
        %636 = vmatmul.mubr.f32.gmra.mrb[0].mxu0 %v500
        %v637 = vpop.f32.mrb[0].mxu0
        %v638 = vadd.f32 %v458, %v637
        %v639 = vpop.f32.mrb[0].mxu0
        %640 = vmatprep.mubr.f32.mxu0 0.0
        %641 = vmatmul.mubr.f32.gmra.mrb[0].mxu0 %v502
        %v642 = vpop.f32.mrb[0].mxu0
        %v643 = vadd.f32 %v463, %v642
        %v644 = vpop.f32.mrb[0].mxu0
        %645 = vmatprep.mubr.f32.mxu0 0.0
        %646 = vmatmul.mubr.f32.gmra.mrb[0].mxu0 %v504
        %v647 = vpop.f32.mrb[0].mxu0
        %v648 = vadd.f32 %v468, %v647
        %v649 = vpop.f32.mrb[0].mxu0
        %650 = vmatprep.mubr.f32.mxu0 0.0
        %651 = vmatmul.mubr.f32.gmra.mrb[0].mxu0 %v506
        %v652 = vpop.f32.mrb[0].mxu0
        %v653 = vadd.f32 %v473, %v652
        %v654 = vpop.f32.mrb[0].mxu0
        %655 = vdwg.mxu0
        %s656 = scalar_lea.vmem %s1, 8
        %v657 = vld [vmem:[%s656] sm:$0xf]
        %vm658 = vcmask 1045504
        %v659 = vrot.slane %v223, 2
        %v660 = vrot.slane %v224, 2
        %v661 = vsel %vm658, %v659, %v660
        %v662 = vrot.slane %v225, 2
        %v663 = vsel %vm658, %v660, %v662
        %v664 = vrot.slane %v226, 2
        %v665 = vsel %vm658, %v662, %v664
        %v666 = vrot.slane %v227, 2
        %v667 = vsel %vm658, %v664, %v666
        %v668 = vrot.slane %v228, 2
        %v669 = vsel %vm658, %v666, %v668
        %v670 = vrot.slane %v229, 2
        %v671 = vsel %vm658, %v668, %v670
        %v672 = vrot.slane %v230, 2
        %v673 = vsel %vm658, %v670, %v672
        %v674 = vrot.slane %v231, 2
        %v675 = vsel %vm658, %v672, %v674
        %v676 = vrot.slane %v232, 2
        %v677 = vsel %vm658, %v674, %v676
        %v678 = vrot.slane %v233, 2
        %v679 = vsel %vm658, %v676, %v678
        %v680 = vrot.slane %v234, 2
        %v681 = vsel %vm658, %v678, %v680
        %v682 = vrot.slane %v235, 2
        %v683 = vsel %vm658, %v680, %v682
        %v684 = vrot.slane %v236, 2
        %v685 = vsel %vm658, %v682, %v684
        %v686 = vrot.slane %v237, 2
        %v687 = vsel %vm658, %v684, %v686
        %v688 = vrot.slane %v238, 2
        %v689 = vsel %vm658, %v686, %v688
        %v690 = vrot.slane %v239, 2
        %v691 = vsel %vm658, %v688, %v690
        %v692 = vsel %vm294, %v661, 0
        %v694 = vsel %vm294, %v663, 0
        %v696 = vsel %vm294, %v665, 0
        %v698 = vsel %vm294, %v667, 0
        %v700 = vsel %vm294, %v669, 0
        %v702 = vsel %vm294, %v671, 0
        %v704 = vsel %vm294, %v673, 0
        %v706 = vsel %vm294, %v675, 0
        %v708 = vsel %vm294, %v677, 0
        %v710 = vsel %vm294, %v679, 0
        %v712 = vsel %vm294, %v681, 0
        %v714 = vsel %vm294, %v683, 0
        %v716 = vsel %vm294, %v685, 0
        %v718 = vsel %vm294, %v687, 0
        %v720 = vsel %vm294, %v689, 0
        %v722 = vsel %vm294, %v691, 0
        %v725 = vsel %vm327, %v657, 0
        %727 = vmatprep.subr.mxu0 0.0
        %728 = vmatpush1.msra.mxu0 %v725
        %729 = vmatprep.subr.mxu0 0.0
        %730 = vmatpush1.msra.mxu0 0.0
        %731 = vmatprep.subr.mxu0 0.0
        %732 = vmatpush1.msra.mxu0 0.0
        %733 = vmatprep.subr.mxu0 0.0
        %734 = vmatpush1.msra.mxu0 0.0
        %735 = vmatprep.subr.mxu0 0.0
        %736 = vmatpush1.msra.mxu0 0.0
        %737 = vmatprep.subr.mxu0 0.0
        %738 = vmatpush1.msra.mxu0 0.0
        %739 = vmatprep.subr.mxu0 0.0
        %740 = vmatpush1.msra.mxu0 0.0
        %741 = vmatprep.subr.mxu0 0.0
        %742 = vmatpush1.msra.mxu0 0.0
        %743 = vmatprep.subr.mxu0 0.0
        %744 = vmatpush1.msra.mxu0 0.0
        %745 = vmatprep.subr.mxu0 0.0
        %746 = vmatpush1.msra.mxu0 0.0
        %747 = vmatprep.subr.mxu0 0.0
        %748 = vmatpush1.msra.mxu0 0.0
        %749 = vmatprep.subr.mxu0 0.0
        %750 = vmatpush1.msra.mxu0 0.0
        %751 = vmatprep.subr.mxu0 0.0
        %752 = vmatpush1.msra.mxu0 0.0
        %753 = vmatprep.subr.mxu0 0.0
        %754 = vmatpush1.msra.mxu0 0.0
        %755 = vmatprep.subr.mxu0 0.0
        %756 = vmatpush1.msra.mxu0 0.0
        %757 = vmatprep.subr.mxu0 0.0
        %758 = vmatpush1.msra.mxu0 0.0
        %759 = vmatprep.subr.mxu0 0.0
        %760 = vmatpush1.msra.mxu0 0.0
        %761 = vmatprep.subr.mxu0 0.0
        %762 = vmatpush1.msra.mxu0 0.0
        %763 = vmatprep.subr.mxu0 0.0
        %764 = vmatpush1.msra.mxu0 0.0
        %765 = vmatprep.subr.mxu0 0.0
        %766 = vmatpush1.msra.mxu0 0.0
        %767 = vmatprep.subr.mxu0 0.0
        %768 = vmatpush1.msra.mxu0 0.0
        %769 = vmatprep.subr.mxu0 0.0
        %770 = vmatpush1.msra.mxu0 0.0
        %771 = vmatprep.subr.mxu0 0.0
        %772 = vmatpush1.msra.mxu0 0.0
        %773 = vmatprep.subr.mxu0 0.0
        %774 = vmatpush1.msra.mxu0 0.0
        %775 = vmatprep.subr.mxu0 0.0
        %776 = vmatpush1.msra.mxu0 0.0
        %777 = vmatprep.subr.mxu0 0.0
        %778 = vmatpush1.msra.mxu0 0.0
        %779 = vmatprep.subr.mxu0 0.0
        %780 = vmatpush1.msra.mxu0 0.0
        %781 = vmatprep.subr.mxu0 0.0
        %782 = vmatpush1.msra.mxu0 0.0
        %783 = vmatprep.subr.mxu0 0.0
        %784 = vmatpush1.msra.mxu0 0.0
        %785 = vmatprep.subr.mxu0 0.0
        %786 = vmatpush1.msra.mxu0 0.0
        %787 = vmatprep.subr.mxu0 0.0
        %788 = vmatpush1.msra.mxu0 0.0
        %789 = vmatprep.subr.mxu0 0.0
        %790 = vmatpush1.msra.mxu0 0.0
        %791 = vmatprep.mubr.f32.mxu0 0.0
        %792 = vmatmul.mubr.f32.gmra.mrb[0].mxu0 %v692
        %v793 = vpop.f32.mrb[0].mxu0
        %v794 = vadd.f32 0.0, %v793
        %v795 = vpop.f32.mrb[0].mxu0
        %796 = vmatprep.mubr.f32.mxu0 0.0
        %797 = vmatmul.mubr.f32.gmra.mrb[0].mxu0 %v694
        %v798 = vpop.f32.mrb[0].mxu0
        %v799 = vadd.f32 0.0, %v798
        %v800 = vpop.f32.mrb[0].mxu0
        %801 = vmatprep.mubr.f32.mxu0 0.0
        %802 = vmatmul.mubr.f32.gmra.mrb[0].mxu0 %v696
        %v803 = vpop.f32.mrb[0].mxu0
        %v804 = vadd.f32 0.0, %v803
        %v805 = vpop.f32.mrb[0].mxu0
        %806 = vmatprep.mubr.f32.mxu0 0.0
        %807 = vmatmul.mubr.f32.gmra.mrb[0].mxu0 %v698
        %v808 = vpop.f32.mrb[0].mxu0
        %v809 = vadd.f32 0.0, %v808
        %v810 = vpop.f32.mrb[0].mxu0
        %811 = vmatprep.mubr.f32.mxu0 0.0
        %812 = vmatmul.mubr.f32.gmra.mrb[0].mxu0 %v700
        %v813 = vpop.f32.mrb[0].mxu0
        %v814 = vadd.f32 0.0, %v813
        %v815 = vpop.f32.mrb[0].mxu0
        %816 = vmatprep.mubr.f32.mxu0 0.0
        %817 = vmatmul.mubr.f32.gmra.mrb[0].mxu0 %v702
        %v818 = vpop.f32.mrb[0].mxu0
        %v819 = vadd.f32 0.0, %v818
        %v820 = vpop.f32.mrb[0].mxu0
        %821 = vmatprep.mubr.f32.mxu0 0.0
        %822 = vmatmul.mubr.f32.gmra.mrb[0].mxu0 %v704
        %v823 = vpop.f32.mrb[0].mxu0
        %v824 = vadd.f32 0.0, %v823
        %v825 = vpop.f32.mrb[0].mxu0
        %826 = vmatprep.mubr.f32.mxu0 0.0
        %827 = vmatmul.mubr.f32.gmra.mrb[0].mxu0 %v706
        %v828 = vpop.f32.mrb[0].mxu0
        %v829 = vadd.f32 0.0, %v828
        %v830 = vpop.f32.mrb[0].mxu0
        %831 = vmatprep.mubr.f32.mxu0 0.0
        %832 = vmatmul.mubr.f32.gmra.mrb[0].mxu0 %v708
        %v833 = vpop.f32.mrb[0].mxu0
        %v834 = vadd.f32 0.0, %v833
        %v835 = vpop.f32.mrb[0].mxu0
        %836 = vmatprep.mubr.f32.mxu0 0.0
        %837 = vmatmul.mubr.f32.gmra.mrb[0].mxu0 %v710
        %v838 = vpop.f32.mrb[0].mxu0
        %v839 = vadd.f32 0.0, %v838
        %v840 = vpop.f32.mrb[0].mxu0
        %841 = vmatprep.mubr.f32.mxu0 0.0
        %842 = vmatmul.mubr.f32.gmra.mrb[0].mxu0 %v712
        %v843 = vpop.f32.mrb[0].mxu0
        %v844 = vadd.f32 0.0, %v843
        %v845 = vpop.f32.mrb[0].mxu0
        %846 = vmatprep.mubr.f32.mxu0 0.0
        %847 = vmatmul.mubr.f32.gmra.mrb[0].mxu0 %v714
        %v848 = vpop.f32.mrb[0].mxu0
        %v849 = vadd.f32 0.0, %v848
        %v850 = vpop.f32.mrb[0].mxu0
        %851 = vmatprep.mubr.f32.mxu0 0.0
        %852 = vmatmul.mubr.f32.gmra.mrb[0].mxu0 %v716
        %v853 = vpop.f32.mrb[0].mxu0
        %v854 = vadd.f32 0.0, %v853
        %v855 = vpop.f32.mrb[0].mxu0
        %856 = vmatprep.mubr.f32.mxu0 0.0
        %857 = vmatmul.mubr.f32.gmra.mrb[0].mxu0 %v718
        %v858 = vpop.f32.mrb[0].mxu0
        %v859 = vadd.f32 0.0, %v858
        %v860 = vpop.f32.mrb[0].mxu0
        %861 = vmatprep.mubr.f32.mxu0 0.0
        %862 = vmatmul.mubr.f32.gmra.mrb[0].mxu0 %v720
        %v863 = vpop.f32.mrb[0].mxu0
        %v864 = vadd.f32 0.0, %v863
        %v865 = vpop.f32.mrb[0].mxu0
        %866 = vmatprep.mubr.f32.mxu0 0.0
        %867 = vmatmul.mubr.f32.gmra.mrb[0].mxu0 %v722
        %v868 = vpop.f32.mrb[0].mxu0
        %v869 = vadd.f32 0.0, %v868
        %v870 = vpop.f32.mrb[0].mxu0
        %871 = vdwg.mxu0
        %v872 = vadd.f32 %v578, %v794
        %v873 = vadd.f32 %v583, %v799
        %v874 = vadd.f32 %v588, %v804
        %v875 = vadd.f32 %v593, %v809
        %v876 = vadd.f32 %v598, %v814
        %v877 = vadd.f32 %v603, %v819
        %v878 = vadd.f32 %v608, %v824
        %v879 = vadd.f32 %v613, %v829
        %v880 = vadd.f32 %v618, %v834
        %v881 = vadd.f32 %v623, %v839
        %v882 = vadd.f32 %v628, %v844
        %v883 = vadd.f32 %v633, %v849
        %v884 = vadd.f32 %v638, %v854
        %v885 = vadd.f32 %v643, %v859
        %v886 = vadd.f32 %v648, %v864
        %v887 = vadd.f32 %v653, %v869
        %v888 = vld [vmem:[%s2] sm:$0x1]
        %v890 = vlaneseq
        %v891 = vshrl.u32 %v890, 7
        %v892 = vsub.s32 0, %v891
        %v893 = vrot.slane %v888, %v892
        %v895 = vadd.f32 %v872, %v893
        %v896 = vadd.f32 %v873, %v893
        %v897 = vadd.f32 %v874, %v893
        %v898 = vadd.f32 %v875, %v893
        %v899 = vadd.f32 %v876, %v893
        %v900 = vadd.f32 %v877, %v893
        %v901 = vadd.f32 %v878, %v893
        %v902 = vadd.f32 %v879, %v893
        %v903 = vadd.f32 %v880, %v893
        %v904 = vadd.f32 %v881, %v893
        %v905 = vadd.f32 %v882, %v893
        %v906 = vadd.f32 %v883, %v893
        %v907 = vadd.f32 %v884, %v893
        %v908 = vadd.f32 %v885, %v893
        %v909 = vadd.f32 %v886, %v893
        %v910 = vadd.f32 %v887, %v893
        %v911 = vmax.f32 %v895, 0.0
        %v912 = vmax.f32 %v896, 0.0
        %v913 = vmax.f32 %v897, 0.0
        %v914 = vmax.f32 %v898, 0.0
        %v915 = vmax.f32 %v899, 0.0
        %v916 = vmax.f32 %v900, 0.0
        %v917 = vmax.f32 %v901, 0.0
        %v918 = vmax.f32 %v902, 0.0
        %v919 = vmax.f32 %v903, 0.0
        %v920 = vmax.f32 %v904, 0.0
        %v921 = vmax.f32 %v905, 0.0
        %v922 = vmax.f32 %v906, 0.0
        %v923 = vmax.f32 %v907, 0.0
        %v924 = vmax.f32 %v908, 0.0
        %v925 = vmax.f32 %v909, 0.0
        %v926 = vmax.f32 %v910, 0.0
        %v927 = vld [vmem:[%s3] sm:$0xff]
        %v928 = vld [vmem:[%s4] sm:$0x1]
        %v930 = vlaneseq
        %v931 = vshrl.u32 %v930, 7
        %v932 = vsub.s32 0, %v931
        %v933 = vrot.slane %v928, %v932
        %vm935 = vcmask 64512
        %v937 = vsel %vm935, %v911, 0
        %v940 = vsel %vm935, %v912, 0
        %v943 = vsel %vm935, %v913, 0
        %v946 = vsel %vm935, %v914, 0
        %v949 = vsel %vm935, %v915, 0
        %v952 = vsel %vm935, %v916, 0
        %v955 = vsel %vm935, %v917, 0
        %v958 = vsel %vm935, %v918, 0
        %v961 = vsel %vm935, %v919, 0
        %v964 = vsel %vm935, %v920, 0
        %v967 = vsel %vm935, %v921, 0
        %v970 = vsel %vm935, %v922, 0
        %v973 = vsel %vm935, %v923, 0
        %v976 = vsel %vm935, %v924, 0
        %v979 = vsel %vm935, %v925, 0
        %v982 = vsel %vm935, %v926, 0
        %984 = vmatprep.subr.mxu0 0.0
        %985 = vmatpush1.msra.mxu0 %v927
        %986 = vmatprep.subr.mxu0 0.0
        %987 = vmatpush1.msra.mxu0 0.0
        %988 = vmatprep.subr.mxu0 0.0
        %989 = vmatpush1.msra.mxu0 0.0
        %990 = vmatprep.subr.mxu0 0.0
        %991 = vmatpush1.msra.mxu0 0.0
        %992 = vmatprep.subr.mxu0 0.0
        %993 = vmatpush1.msra.mxu0 0.0
        %994 = vmatprep.subr.mxu0 0.0
        %995 = vmatpush1.msra.mxu0 0.0
        %996 = vmatprep.subr.mxu0 0.0
        %997 = vmatpush1.msra.mxu0 0.0
        %998 = vmatprep.subr.mxu0 0.0
        %999 = vmatpush1.msra.mxu0 0.0
        %1000 = vmatprep.subr.mxu0 0.0
        %1001 = vmatpush1.msra.mxu0 0.0
        %1002 = vmatprep.subr.mxu0 0.0
        %1003 = vmatpush1.msra.mxu0 0.0
        %1004 = vmatprep.subr.mxu0 0.0
        %1005 = vmatpush1.msra.mxu0 0.0
        %1006 = vmatprep.subr.mxu0 0.0
        %1007 = vmatpush1.msra.mxu0 0.0
        %1008 = vmatprep.subr.mxu0 0.0
        %1009 = vmatpush1.msra.mxu0 0.0
        %1010 = vmatprep.subr.mxu0 0.0
        %1011 = vmatpush1.msra.mxu0 0.0
        %1012 = vmatprep.subr.mxu0 0.0
        %1013 = vmatpush1.msra.mxu0 0.0
        %1014 = vmatprep.subr.mxu0 0.0
        %1015 = vmatpush1.msra.mxu0 0.0
        %1016 = vmatprep.subr.mxu0 0.0
        %1017 = vmatpush1.msra.mxu0 0.0
        %1018 = vmatprep.subr.mxu0 0.0
        %1019 = vmatpush1.msra.mxu0 0.0
        %1020 = vmatprep.subr.mxu0 0.0
        %1021 = vmatpush1.msra.mxu0 0.0
        %1022 = vmatprep.subr.mxu0 0.0
        %1023 = vmatpush1.msra.mxu0 0.0
        %1024 = vmatprep.subr.mxu0 0.0
        %1025 = vmatpush1.msra.mxu0 0.0
        %1026 = vmatprep.subr.mxu0 0.0
        %1027 = vmatpush1.msra.mxu0 0.0
        %1028 = vmatprep.subr.mxu0 0.0
        %1029 = vmatpush1.msra.mxu0 0.0
        %1030 = vmatprep.subr.mxu0 0.0
        %1031 = vmatpush1.msra.mxu0 0.0
        %1032 = vmatprep.subr.mxu0 0.0
        %1033 = vmatpush1.msra.mxu0 0.0
        %1034 = vmatprep.subr.mxu0 0.0
        %1035 = vmatpush1.msra.mxu0 0.0
        %1036 = vmatprep.subr.mxu0 0.0
        %1037 = vmatpush1.msra.mxu0 0.0
        %1038 = vmatprep.subr.mxu0 0.0
        %1039 = vmatpush1.msra.mxu0 0.0
        %1040 = vmatprep.subr.mxu0 0.0
        %1041 = vmatpush1.msra.mxu0 0.0
        %1042 = vmatprep.subr.mxu0 0.0
        %1043 = vmatpush1.msra.mxu0 0.0
        %1044 = vmatprep.subr.mxu0 0.0
        %1045 = vmatpush1.msra.mxu0 0.0
        %1046 = vmatprep.subr.mxu0 0.0
        %1047 = vmatpush1.msra.mxu0 0.0
        %1048 = vmatprep.mubr.f32.mxu0 0.0
        %1049 = vmatmul.mubr.f32.gmra.mrb[0].mxu0 %v937
        %v1050 = vpop.f32.mrb[0].mxu0
        %v1051 = vadd.f32 %v933, %v1050
        %v1052 = vpop.f32.mrb[0].mxu0
        %1053 = vmatprep.mubr.f32.mxu0 0.0
        %1054 = vmatmul.mubr.f32.gmra.mrb[0].mxu0 %v940
        %v1055 = vpop.f32.mrb[0].mxu0
        %v1056 = vadd.f32 %v933, %v1055
        %v1057 = vpop.f32.mrb[0].mxu0
        %1058 = vmatprep.mubr.f32.mxu0 0.0
        %1059 = vmatmul.mubr.f32.gmra.mrb[0].mxu0 %v943
        %v1060 = vpop.f32.mrb[0].mxu0
        %v1061 = vadd.f32 %v933, %v1060
        %v1062 = vpop.f32.mrb[0].mxu0
        %1063 = vmatprep.mubr.f32.mxu0 0.0
        %1064 = vmatmul.mubr.f32.gmra.mrb[0].mxu0 %v946
        %v1065 = vpop.f32.mrb[0].mxu0
        %v1066 = vadd.f32 %v933, %v1065
        %v1067 = vpop.f32.mrb[0].mxu0
        %1068 = vmatprep.mubr.f32.mxu0 0.0
        %1069 = vmatmul.mubr.f32.gmra.mrb[0].mxu0 %v949
        %v1070 = vpop.f32.mrb[0].mxu0
        %v1071 = vadd.f32 %v933, %v1070
        %v1072 = vpop.f32.mrb[0].mxu0
        %1073 = vmatprep.mubr.f32.mxu0 0.0
        %1074 = vmatmul.mubr.f32.gmra.mrb[0].mxu0 %v952
        %v1075 = vpop.f32.mrb[0].mxu0
        %v1076 = vadd.f32 %v933, %v1075
        %v1077 = vpop.f32.mrb[0].mxu0
        %1078 = vmatprep.mubr.f32.mxu0 0.0
        %1079 = vmatmul.mubr.f32.gmra.mrb[0].mxu0 %v955
        %v1080 = vpop.f32.mrb[0].mxu0
        %v1081 = vadd.f32 %v933, %v1080
        %v1082 = vpop.f32.mrb[0].mxu0
        %1083 = vmatprep.mubr.f32.mxu0 0.0
        %1084 = vmatmul.mubr.f32.gmra.mrb[0].mxu0 %v958
        %v1085 = vpop.f32.mrb[0].mxu0
        %v1086 = vadd.f32 %v933, %v1085
        %v1087 = vpop.f32.mrb[0].mxu0
        %1088 = vmatprep.mubr.f32.mxu0 0.0
        %1089 = vmatmul.mubr.f32.gmra.mrb[0].mxu0 %v961
        %v1090 = vpop.f32.mrb[0].mxu0
        %v1091 = vadd.f32 %v933, %v1090
        %v1092 = vpop.f32.mrb[0].mxu0
        %1093 = vmatprep.mubr.f32.mxu0 0.0
        %1094 = vmatmul.mubr.f32.gmra.mrb[0].mxu0 %v964
        %v1095 = vpop.f32.mrb[0].mxu0
        %v1096 = vadd.f32 %v933, %v1095
        %v1097 = vpop.f32.mrb[0].mxu0
        %1098 = vmatprep.mubr.f32.mxu0 0.0
        %1099 = vmatmul.mubr.f32.gmra.mrb[0].mxu0 %v967
        %v1100 = vpop.f32.mrb[0].mxu0
        %v1101 = vadd.f32 %v933, %v1100
        %v1102 = vpop.f32.mrb[0].mxu0
        %1103 = vmatprep.mubr.f32.mxu0 0.0
        %1104 = vmatmul.mubr.f32.gmra.mrb[0].mxu0 %v970
        %v1105 = vpop.f32.mrb[0].mxu0
        %v1106 = vadd.f32 %v933, %v1105
        %v1107 = vpop.f32.mrb[0].mxu0
        %1108 = vmatprep.mubr.f32.mxu0 0.0
        %1109 = vmatmul.mubr.f32.gmra.mrb[0].mxu0 %v973
        %v1110 = vpop.f32.mrb[0].mxu0
        %v1111 = vadd.f32 %v933, %v1110
        %v1112 = vpop.f32.mrb[0].mxu0
        %1113 = vmatprep.mubr.f32.mxu0 0.0
        %1114 = vmatmul.mubr.f32.gmra.mrb[0].mxu0 %v976
        %v1115 = vpop.f32.mrb[0].mxu0
        %v1116 = vadd.f32 %v933, %v1115
        %v1117 = vpop.f32.mrb[0].mxu0
        %1118 = vmatprep.mubr.f32.mxu0 0.0
        %1119 = vmatmul.mubr.f32.gmra.mrb[0].mxu0 %v979
        %v1120 = vpop.f32.mrb[0].mxu0
        %v1121 = vadd.f32 %v933, %v1120
        %v1122 = vpop.f32.mrb[0].mxu0
        %1123 = vmatprep.mubr.f32.mxu0 0.0
        %1124 = vmatmul.mubr.f32.gmra.mrb[0].mxu0 %v982
        %v1125 = vpop.f32.mrb[0].mxu0
        %v1126 = vadd.f32 %v933, %v1125
        %v1127 = vpop.f32.mrb[0].mxu0
        %1128 = vdwg.mxu0
        %1129 = vxpose.xlu0.b32.start [1/16] %v1051, 128
        %1130 = vxpose.xlu0.b32.cont [2/16] %v1056, 128
        %1131 = vxpose.xlu0.b32.cont [3/16] %v1061, 128
        %1132 = vxpose.xlu0.b32.cont [4/16] %v1066, 128
        %1133 = vxpose.xlu0.b32.cont [5/16] %v1071, 128
        %1134 = vxpose.xlu0.b32.cont [6/16] %v1076, 128
        %1135 = vxpose.xlu0.b32.cont [7/16] %v1081, 128
        %1136 = vxpose.xlu0.b32.cont [8/16] %v1086, 128
        %1137 = vxpose.xlu0.b32.cont [9/16] %v1091, 128
        %1138 = vxpose.xlu0.b32.cont [10/16] %v1096, 128
        %1139 = vxpose.xlu0.b32.cont [11/16] %v1101, 128
        %1140 = vxpose.xlu0.b32.cont [12/16] %v1106, 128
        %1141 = vxpose.xlu0.b32.cont [13/16] %v1111, 128
        %1142 = vxpose.xlu0.b32.cont [14/16] %v1116, 128
        %1143 = vxpose.xlu0.b32.cont [15/16] %v1121, 128
        %1144 = vxpose.xlu0.b32.end [16/16] %v1126, 128
        %v1145 = vpop.trf.xlu0
        %v1146 = vpop.trf.xlu0
        %v1147 = vpop.trf.xlu0
        %v1148 = vpop.trf.xlu0
        %v1149 = vpop.trf.xlu0
        %v1150 = vpop.trf.xlu0
        %v1151 = vpop.trf.xlu0
        %v1152 = vpop.trf.xlu0
        %v1153 = vpop.trf.xlu0
        %v1154 = vpop.trf.xlu0
        %v1155 = vpop.trf.xlu0
        %v1156 = vpop.trf.xlu0
        %v1157 = vpop.trf.xlu0
        %v1158 = vpop.trf.xlu0
        %v1159 = vpop.trf.xlu0
        %v1160 = vpop.trf.xlu0
        %v1161 = vpack.c.bf16 %v1146, %v1145
        %v1162 = vpack.c.bf16 %v1148, %v1147
        %v1163 = vpack.c.bf16 %v1150, %v1149
        %v1164 = vpack.c.bf16 %v1152, %v1151
        %v1165 = vpack.c.bf16 %v1154, %v1153
        %v1166 = vpack.c.bf16 %v1156, %v1155
        %v1167 = vpack.c.bf16 %v1158, %v1157
        %v1168 = vpack.c.bf16 %v1160, %v1159
        %v1177 = vunpack.c.l.b16 %v1161
        %v1178 = vunpack.c.h.b16 %v1161
        %v1179 = vunpack.c.l.b16 %v1162
        %v1180 = vunpack.c.h.b16 %v1162
        %v1181 = vunpack.c.l.b16 %v1163
        %v1182 = vunpack.c.h.b16 %v1163
        %v1183 = vunpack.c.l.b16 %v1164
        %v1184 = vunpack.c.h.b16 %v1164
        %v1185 = vunpack.c.l.b16 %v1165
        %v1186 = vunpack.c.h.b16 %v1165
        %v1187 = vunpack.c.l.b16 %v1166
        %v1188 = vunpack.c.h.b16 %v1166
        %v1189 = vunpack.c.l.b16 %v1167
        %v1190 = vunpack.c.h.b16 %v1167
        %v1191 = vunpack.c.l.b16 %v1168
        %v1192 = vunpack.c.h.b16 %v1168
        %v1193 = vpack.c.b16 %v1177, %v1177
        %v1194 = vpack.c.b16 %v1178, %v1178
        %v1195 = vpack.c.b16 %v1179, %v1179
        %v1196 = vpack.c.b16 %v1180, %v1180
        %v1197 = vpack.c.b16 %v1181, %v1181
        %v1198 = vpack.c.b16 %v1182, %v1182
        %v1199 = vpack.c.b16 %v1183, %v1183
        %v1200 = vpack.c.b16 %v1184, %v1184
        %v1201 = vpack.c.b16 %v1185, %v1185
        %v1202 = vpack.c.b16 %v1186, %v1186
        %v1203 = vpack.c.b16 %v1187, %v1187
        %v1204 = vpack.c.b16 %v1188, %v1188
        %v1205 = vpack.c.b16 %v1189, %v1189
        %v1206 = vpack.c.b16 %v1190, %v1190
        %v1207 = vpack.c.b16 %v1191, %v1191
        %v1208 = vpack.c.b16 %v1192, %v1192
        %1225 = vst [vmem:[%s217] sm:$0xf] %v1193
        %1226 = vst [vmem:[%s217 + $0x4] sm:$0xf] %v1194
        %1227 = vst [vmem:[%s217 + $0x8] sm:$0xf] %v1195
        %1228 = vst [vmem:[%s217 + $0xc] sm:$0xf] %v1196
        %1229 = vst [vmem:[%s217 + $0x10] sm:$0xf] %v1197
        %1230 = vst [vmem:[%s217 + $0x14] sm:$0xf] %v1198
        %1231 = vst [vmem:[%s217 + $0x18] sm:$0xf] %v1199
        %1232 = vst [vmem:[%s217 + $0x1c] sm:$0xf] %v1200
        %1233 = vst [vmem:[%s217 + $0x20] sm:$0xf] %v1201
        %1234 = vst [vmem:[%s217 + $0x24] sm:$0xf] %v1202
        %1235 = vst [vmem:[%s217 + $0x28] sm:$0xf] %v1203
        %1236 = vst [vmem:[%s217 + $0x2c] sm:$0xf] %v1204
        %1237 = vst [vmem:[%s217 + $0x30] sm:$0xf] %v1205
        %1238 = vst [vmem:[%s217 + $0x34] sm:$0xf] %v1206
        %1239 = vst [vmem:[%s217 + $0x38] sm:$0xf] %v1207
        %1240 = vst [vmem:[%s217 + $0x3c] sm:$0xf] %v1208
        %s1241 = sand.u32 %s137, 1
        %s1242 = scalar_lea.sflag [#allocation3], %s1241
        %s1243 = sand.u32 %s137, 1
        %s1244 = smul.addr %s1243, 64
        %s1245 = scalar_lea.vmem [#allocation2], %s1244
        // Predicated region
        $region41: #{tpu_custom_call.1} parent=39 // pred_check
          %p1246 = pneg %p147
        $region42: #{tpu_custom_call.1} parent=39 // pred_check_branch
          %1248 = sbr.rel (%p1246) target = $region44
        $region43: #{tpu_custom_call.1} parent=39 // pred_region
          %s1250 = ssub.s32 1024, 1024
          %1251 = vsyncadd %s1242, %s1250
          %s1252 = smul.addr %s19, 16
          %s1253 = smul.addr %s1252, 64
          %s1254 = scalar_lea.hbm %s5, %s1253
          %s1255 = sshll.u32 %s1245, 4
          %s1256 = int_to_ptr.vmem [resolvable:$true] %s1255
          %1261 = dma.vmem_to_hbm [thread:$0]  %s1256, 1024, %s1254, %s1242, 64, 64, 4
        $region44: #{tpu_custom_call.1} parent=39 // pred_fallthru
          _
      $region40: #{tpu_custom_call.1} parent=5 // pred_fallthru
        _
      %p1262 = scmp.le.s32.totalorder 2, %s14
      // Predicated region
      $region45: #{tpu_custom_call.1} parent=5 // pred_check
        %p1263 = pneg %p1262
      $region46: #{tpu_custom_call.1} parent=5 // pred_check_branch
        %1265 = sbr.rel (%p1263) target = $region48
      $region47: #{tpu_custom_call.1} parent=5 // pred_region
        %s1266 = ssub.s32 %s14, 2
        // Predicated region
        $region49: #{tpu_custom_call.1} parent=47 // pred_check
          %p1267 = pneg %p153
        $region50: #{tpu_custom_call.1} parent=47 // pred_check_branch
          %1269 = sbr.rel (%p1267) target = $region52
        $region51: #{tpu_custom_call.1} parent=47 // pred_region
          %s1270 = sand.u32 %s138, 1
          %s1271 = scalar_lea.sflag [#allocation3], %s1270
          %s1272 = sand.u32 %s138, 1
          %s1273 = smul.addr %s1272, 64
          %s1274 = scalar_lea.vmem [#allocation2], %s1273
          %1275 = dma.done %s1271, 1024
        $region52: #{tpu_custom_call.1} parent=47 // pred_fallthru
          _
      $region48: #{tpu_custom_call.1} parent=5 // pred_fallthru
        _
    $region6: #{tpu_custom_call.1} parent=1 // loop_footer
      %s18 = sadd.s32 1, %s14
    $region7: #{tpu_custom_call.1} parent=1 // loop_footer_branch
      %13 = sbr.rel target = $region3
    $region8: #{tpu_custom_call.1} parent=1 // loop_exit
      _
    %1276 = vsyncpa [#allocation3], 1
    %s1277 = scalar_lea.sflag [#allocation3], 1
    %1278 = vsyncpa %s1277, 1

</llo_original>
